<compile_context>
chip_gen: v5e
topology: v5e:2x2
jax: 0.10.0
libtpu: 0.0.40
codegen_flags: <defaults>
</compile_context>

<pallas_src>
import functools

import jax
import jax.numpy as jnp
from jax import lax
from jax.experimental import pallas as pl
from jax.experimental.pallas import tpu as pltpu


# ----------------------------------------------------------------------------
# chip-aware knobs (degrade gracefully if introspection is unavailable)
# ----------------------------------------------------------------------------
def _vmem_capacity_bytes():
    try:
        return int(pltpu.get_tpu_info().vmem_capacity_bytes)
    except Exception:
        return 128 * 1024 * 1024


_VMEM_CAP = _vmem_capacity_bytes()
_BIG_VMEM = _VMEM_CAP >= 100 * 1024 * 1024          # v5e / v6e: 128 MiB VMEM
_MAX_ROW_TILE = 512 if _BIG_VMEM else 128            # v7x (64 MiB): smaller tile
_VMEM_LIMIT = (96 if _BIG_VMEM else 48) * 1024 * 1024


def _num_tensorcores():
    try:
        return min(2, max(1, int(getattr(jax.devices()[0], "num_cores", 1))))
    except Exception:
        return 1


# ----------------------------------------------------------------------------
# helpers
# ----------------------------------------------------------------------------
def _row_tile_and_pad(m, max_tile=None):
    """Sublane-friendly row tile + padded row count (never a full-M fallback)."""
    if max_tile is None:
        max_tile = _MAX_ROW_TILE
    if m <= max_tile:
        return m, m                                   # single full-dim block
    top = max_tile - (max_tile % 16)
    for t in range(top, max(top // 2, 16) - 1, -16):
        if m % t == 0:
            return t, m
    return top, ((m + top - 1) // top) * top          # pad rows, slice later


def _time_chunk_and_pad(s, t_chunk=32):
    """Time chunk for the GRU; pads S rather than degrading to T=1."""
    t = min(t_chunk, s)
    for c in range(t, max(t // 2, 1) - 1, -1):
        if s % c == 0:
            return c, s
    return t, ((s + t - 1) // t) * t


def _pad_leading(a, n):
    if a.shape[0] == n:
        return a
    pad = [(0, n - a.shape[0])] + [(0, 0)] * (a.ndim - 1)
    return jnp.pad(a, pad)


def _ln(x, gamma, beta, eps=1e-5):
    x = x.astype(jnp.float32)
    mu = jnp.mean(x, axis=-1, keepdims=True)
    var = jnp.mean(jnp.square(x - mu), axis=-1, keepdims=True)
    return (x - mu) * lax.rsqrt(var + eps) * gamma + beta


# ----------------------------------------------------------------------------
# Kernel 1: fused downsample + hoisted GRU layer-1 input projection (bf16 MXU)
#   gi1 = (x @ Wd + bd) @ Wih1 + (bih1 + bhh1[r,z folded])     row-tiled
# ----------------------------------------------------------------------------
def _proj_gi_kernel(x_ref, wd_ref, bd_ref, wih1_ref, bih1_ref, o_ref):
    ds = (jnp.dot(x_ref[...].astype(jnp.bfloat16), wd_ref[...],
                  preferred_element_type=jnp.float32) + bd_ref[...])
    gi = (jnp.dot(ds.astype(jnp.bfloat16), wih1_ref[...],
                  preferred_element_type=jnp.float32) + bih1_ref[...])
    o_ref[...] = gi.astype(o_ref.dtype)


def downsample_and_gi(x2d, w_down_bf, b_down, wih1_bf, bih1_fused):
    M, D = x2d.shape
    H = w_down_bf.shape[1]
    G = wih1_bf.shape[1]                              # 3H
    TM, MP = _row_tile_and_pad(M)
    xp = _pad_leading(x2d, MP)
    # NOTE: constant-index weight specs would benefit from single-buffering
    # (pl.Buffered(1)); omitted for portability across jax versions.
    out = pl.pallas_call(
        _proj_gi_kernel,
        out_shape=jax.ShapeDtypeStruct((MP, G), jnp.bfloat16),
        grid=(MP // TM,),
        in_specs=[pl.BlockSpec((TM, D), lambda i: (i, 0)),
                  pl.BlockSpec((D, H), lambda i: (0, 0)),
                  pl.BlockSpec((1, H), lambda i: (0, 0)),
                  pl.BlockSpec((H, G), lambda i: (0, 0)),
                  pl.BlockSpec((1, G), lambda i: (0, 0))],
        out_specs=pl.BlockSpec((TM, G), lambda i: (i, 0)),
        compiler_params=pltpu.CompilerParams(
            dimension_semantics=("parallel",),
            vmem_limit_bytes=_VMEM_LIMIT),
    )(xp, w_down_bf, b_down.reshape(1, H), wih1_bf, bih1_fused.reshape(1, G))
    return out[:M]


# ----------------------------------------------------------------------------
# Kernel 2: 2-layer unidirectional GRU (exact nn.GRU semantics)
#   * layer-1 input projection (incl. r/z hidden biases) is precomputed (gi1).
#   * layer-2 input + recurrent matmuls fused into one (2H x 4H) bf16 matmul:
#       columns [0:2H]  = r/z sums, [2H:3H] = Wi_n h1 part, [3H:4H] = Wh_n h2.
#   * grid = (batch_chunks ["parallel"], time_chunks ["arbitrary"]);
#     hidden state in VMEM scratch, chunk-local carry in fori_loop registers.
# ----------------------------------------------------------------------------
def _gru2_kernel(gi1_ref, whh1_ref, bhh1n_ref, w2big_ref, b2_ref,
                 o_ref, h1_scr, h2_scr, *, unroll):
    @pl.when(pl.program_id(1) == 0)
    def _():
        h1_scr[...] = jnp.zeros_like(h1_scr)
        h2_scr[...] = jnp.zeros_like(h2_scr)

    T = o_ref.shape[0]                                # static chunk length
    H = h1_scr.shape[-1]

    def body(t, carry):
        h1p, h2p = carry
        gi1 = gi1_ref[t].astype(jnp.float32)          # (B, 3H), biases fused
        gh1 = (jnp.dot(h1p.astype(jnp.bfloat16), whh1_ref[...],
                       preferred_element_type=jnp.float32) + bhh1n_ref[...])
        r1 = jax.nn.sigmoid(gi1[:, :H] + gh1[:, :H])
        z1 = jax.nn.sigmoid(gi1[:, H:2 * H] + gh1[:, H:2 * H])
        n1 = jnp.tanh(gi1[:, 2 * H:] + r1 * gh1[:, 2 * H:])
        h1 = (1.0 - z1) * n1 + z1 * h1p

        x12 = jnp.concatenate([h1, h2p], axis=-1).astype(jnp.bfloat16)
        g2 = (jnp.dot(x12, w2big_ref[...],
                      preferred_element_type=jnp.float32) + b2_ref[...])
        r2 = jax.nn.sigmoid(g2[:, :H])
        z2 = jax.nn.sigmoid(g2[:, H:2 * H])
        n2 = jnp.tanh(g2[:, 2 * H:3 * H] + r2 * g2[:, 3 * H:])
        h2 = (1.0 - z2) * n2 + z2 * h2p

        o_ref[t] = h2.astype(o_ref.dtype)
        return (h1, h2)

    h1f, h2f = lax.fori_loop(0, T, body, (h1_scr[...], h2_scr[...]),
                             unroll=unroll)
    h1_scr[...] = h1f
    h2_scr[...] = h2f


def gru_2layer(gi1, whh1_bf, bhh1_n, w2big_bf, b2_all, *, t_chunk=32, unroll=4):
    S, B, G = gi1.shape                               # gi1 is bf16, G = 3H
    H = G // 3

    Bp = ((B + 7) // 8) * 8                           # sublane-dense batch
    cores = _num_tensorcores()
    n_bc = cores if (cores > 1 and Bp % (16 * cores) == 0) else 1
    Bc = Bp // n_bc

    T, Sp = _time_chunk_and_pad(S, t_chunk)
    gi1 = jnp.pad(gi1, ((0, Sp - S), (0, Bp - B), (0, 0)))

    kern = functools.partial(_gru2_kernel, unroll=unroll)
    out = pl.pallas_call(
        kern,
        out_shape=jax.ShapeDtypeStruct((Sp, Bp, H), jnp.float32),
        grid=(n_bc, Sp // T),
        in_specs=[pl.BlockSpec((T, Bc, G), lambda bc, tc: (tc, bc, 0)),
                  pl.BlockSpec((H, G), lambda bc, tc: (0, 0)),
                  pl.BlockSpec((1, G), lambda bc, tc: (0, 0)),
                  pl.BlockSpec((2 * H, 4 * H), lambda bc, tc: (0, 0)),
                  pl.BlockSpec((1, 4 * H), lambda bc, tc: (0, 0))],
        out_specs=pl.BlockSpec((T, Bc, H), lambda bc, tc: (tc, bc, 0)),
        scratch_shapes=[pltpu.VMEM((Bc, H), jnp.float32),
                        pltpu.VMEM((Bc, H), jnp.float32)],
        compiler_params=pltpu.CompilerParams(
            dimension_semantics=("parallel", "arbitrary")),
    )(gi1, whh1_bf, bhh1_n.reshape(1, G), w2big_bf, b2_all.reshape(1, 4 * H))
    return out[:S, :B]


# ----------------------------------------------------------------------------
# Kernel 3: fused LayerNorm -> Linear/ReLU -> Linear -> residual -> LayerNorm
#           -> classification head (lane-padded to 128 output lanes)
# ----------------------------------------------------------------------------
def _ffn_cls_kernel(g_ref, res_ref, ga1_ref, be1_ref, w1_ref, b1_ref,
                    w2_ref, b2_ref, ga2_ref, be2_ref, wcls_ref, bcls_ref,
                    o_ref):
    x = _ln(g_ref[...], ga1_ref[...], be1_ref[...])
    h = jnp.maximum(
        jnp.dot(x.astype(jnp.bfloat16), w1_ref[...],
                preferred_element_type=jnp.float32) + b1_ref[...], 0.0)
    y = (jnp.dot(h.astype(jnp.bfloat16), w2_ref[...],
                 preferred_element_type=jnp.float32) + b2_ref[...])
    y = _ln(res_ref[...] + y, ga2_ref[...], be2_ref[...])
    logits = (jnp.dot(y.astype(jnp.bfloat16), wcls_ref[...],
                      preferred_element_type=jnp.float32) + bcls_ref[...])
    o_ref[...] = logits.astype(o_ref.dtype)


def ffn_residual_norm_cls(g, res, ga1, be1, w1, b1, w2, b2, ga2, be2,
                          w_cls, b_cls):
    M, H = g.shape
    _, D = res.shape
    FF = w1.shape[1]
    NC = w_cls.shape[1]                               # padded to 128 lanes
    TM, MP = _row_tile_and_pad(M)
    gp = _pad_leading(g, MP)
    rp = _pad_leading(res, MP)
    out = pl.pallas_call(
        _ffn_cls_kernel,
        out_shape=jax.ShapeDtypeStruct((MP, NC), jnp.float32),
        grid=(MP // TM,),
        in_specs=[pl.BlockSpec((TM, H), lambda i: (i, 0)),
                  pl.BlockSpec((TM, D), lambda i: (i, 0)),
                  pl.BlockSpec((1, H), lambda i: (0, 0)),
                  pl.BlockSpec((1, H), lambda i: (0, 0)),
                  pl.BlockSpec((H, FF), lambda i: (0, 0)),
                  pl.BlockSpec((1, FF), lambda i: (0, 0)),
                  pl.BlockSpec((FF, D), lambda i: (0, 0)),
                  pl.BlockSpec((1, D), lambda i: (0, 0)),
                  pl.BlockSpec((1, D), lambda i: (0, 0)),
                  pl.BlockSpec((1, D), lambda i: (0, 0)),
                  pl.BlockSpec((D, NC), lambda i: (0, 0)),
                  pl.BlockSpec((1, NC), lambda i: (0, 0))],
        out_specs=pl.BlockSpec((TM, NC), lambda i: (i, 0)),
        compiler_params=pltpu.CompilerParams(
            dimension_semantics=("parallel",),
            vmem_limit_bytes=_VMEM_LIMIT),
    )(gp, rp, ga1.reshape(1, H), be1.reshape(1, H), w1, b1.reshape(1, FF),
      w2, b2.reshape(1, D), ga2.reshape(1, D), be2.reshape(1, D),
      w_cls, b_cls.reshape(1, NC))
    return out[:M]


# ----------------------------------------------------------------------------
# Parameters: raw (PyTorch-like, f32) -> kernel-ready (bf16 weights, folded
# biases, pre-stacked layer-2 GRU weight, lane-padded classifier)
# ----------------------------------------------------------------------------
N_CLS_PAD = 128


def init_raw_params(key, vocab, d_model, n_classes):
    H = d_model // 2
    FF = 4 * d_model
    ks = jax.random.split(key, 10)
    s = 0.02
    return {
        # TODO(synk): pretrained Longformer backbone (AutoModel.from_pretrained)
        # has no in-script equivalent; replaced by a deterministic embedding
        # lookup producing the [S, B, d_model] hidden states it would emit.
        "embed": s * jax.random.normal(ks[0], (vocab, d_model), jnp.float32),
        # ResidualLSTM.downsample: Linear(d_model, d_model//2)
        "w_down": s * jax.random.normal(ks[1], (d_model, H), jnp.float32),
        "b_down": jnp.zeros((H,), jnp.float32),
        # nn.GRU layer 0 / 1, weights stored transposed [in, 3H] (r|z|n order)
        "wih1": s * jax.random.normal(ks[2], (H, 3 * H), jnp.float32),
        "whh1": s * jax.random.normal(ks[3], (H, 3 * H), jnp.float32),
        "bih1": 0.01 * jax.random.normal(ks[4], (3 * H,), jnp.float32),
        "bhh1": 0.01 * jax.random.normal(ks[5], (3 * H,), jnp.float32),
        "wih2": s * jax.random.normal(ks[6], (H, 3 * H), jnp.float32),
        "whh2": s * jax.random.normal(ks[7], (H, 3 * H), jnp.float32),
        "bih2": jnp.zeros((3 * H,), jnp.float32),
        "bhh2": jnp.zeros((3 * H,), jnp.float32),
        # norm1 / linear1 / linear2 / norm2 / classification_head
        "ga1": jnp.ones((H,), jnp.float32), "be1": jnp.zeros((H,), jnp.float32),
        "w1": s * jax.random.normal(ks[8], (H, FF), jnp.float32),
        "b1": jnp.zeros((FF,), jnp.float32),
        "w2": s * jax.random.normal(ks[9], (FF, d_model), jnp.float32),
        "b2": jnp.zeros((d_model,), jnp.float32),
        "ga2": jnp.ones((d_model,), jnp.float32),
        "be2": jnp.zeros((d_model,), jnp.float32),
        "w_cls": s * jax.random.normal(ks[0], (d_model, n_classes), jnp.float32),
        "b_cls": jnp.zeros((n_classes,), jnp.float32),
    }


def prepare_params(raw, n_classes):
    D, H = raw["w_down"].shape
    zH = jnp.zeros((H,), jnp.float32)
    zHH = jnp.zeros((H, H), jnp.float32)
    bf = lambda a: a.astype(jnp.bfloat16)

    # fold layer-1 r/z hidden biases into the precomputed input projection
    bih1_fused = raw["bih1"] + jnp.concatenate([raw["bhh1"][:2 * H], zH])
    bhh1_n = jnp.concatenate([zH, zH, raw["bhh1"][2 * H:]])

    # fused layer-2 weight: [h1, h2] @ w2big -> [rz sums | Wi_n h1 | Wh_n h2]
    w2big = jnp.concatenate([
        jnp.concatenate([raw["wih2"][:, :2 * H], raw["wih2"][:, 2 * H:], zHH], 1),
        jnp.concatenate([raw["whh2"][:, :2 * H], zHH, raw["whh2"][:, 2 * H:]], 1),
    ], axis=0)                                        # (2H, 4H)
    b2_all = jnp.concatenate([
        raw["bih2"][:2 * H] + raw["bhh2"][:2 * H],    # r/z
        raw["bih2"][2 * H:],                          # n (input part)
        raw["bhh2"][2 * H:]])                         # n (hidden part, inside r*)

    w_cls_pad = jnp.zeros((D, N_CLS_PAD), jnp.float32).at[:, :n_classes].set(raw["w_cls"])
    b_cls_pad = jnp.zeros((N_CLS_PAD,), jnp.float32).at[:n_classes].set(raw["b_cls"])

    return {
        "embed": raw["embed"],
        "w_down": bf(raw["w_down"]), "b_down": raw["b_down"],
        "wih1": bf(raw["wih1"]), "bih1_fused": bih1_fused,
        "whh1": bf(raw["whh1"]), "bhh1_n": bhh1_n,
        "w2big": bf(w2big), "b2_all": b2_all,
        "ga1": raw["ga1"], "be1": raw["be1"],
        "w1": bf(raw["w1"]), "b1": raw["b1"],
        "w2": bf(raw["w2"]), "b2": raw["b2"],
        "ga2": raw["ga2"], "be2": raw["be2"],
        "w_cls_pad": bf(w_cls_pad), "b_cls_pad": b_cls_pad,
    }


# ----------------------------------------------------------------------------
# Full forward (TransformerModel.forward, eval mode)
# ----------------------------------------------------------------------------
def transformer_model_forward(input_ids, attention_mask, p, n_classes=15):
    B, S = input_ids.shape
    D = p["embed"].shape[1]
    H = D // 2

    # backbone stand-in: time-major [S, B, D] hidden states (no big transpose)
    ids_t = input_ids.T                                   # [S, B]
    mask_t = attention_mask.T[..., None]                  # [S, B, 1]
    hidden = jnp.take(p["embed"], ids_t, axis=0) * mask_t  # [S, B, D]
    x2d = hidden.reshape(S * B, D)                        # residual input

    # ResidualLSTM: downsample + hoisted GRU layer-1 input projection (bf16)
    gi1 = downsample_and_gi(x2d, p["w_down"], p["b_down"],
                            p["wih1"], p["bih1_fused"])   # [S*B, 3H] bf16
    gi1 = gi1.reshape(S, B, 3 * H)

    gru_out = gru_2layer(gi1, p["whh1"], p["bhh1_n"],
                         p["w2big"], p["b2_all"])          # [S, B, H] f32

    # fused: norm1 -> linear1/ReLU -> linear2 -> residual -> norm2 -> cls head
    logits_pad = ffn_residual_norm_cls(
        gru_out.reshape(S * B, H), x2d,
        p["ga1"], p["be1"], p["w1"], p["b1"], p["w2"], p["b2"],
        p["ga2"], p["be2"], p["w_cls_pad"], p["b_cls_pad"])  # [S*B, 128]

    logits = logits_pad.reshape(S, B, N_CLS_PAD)[:, :, :n_classes]
    return jnp.transpose(logits, (1, 0, 2))               # [B, S, n_classes]


if __name__ == "__main__":
    B, S = 2, 8
    VOCAB, D_MODEL, N_CLASSES = 64, 256, 15

    key = jax.random.PRNGKey(0)
    k_param, k_ids = jax.random.split(key)

    raw = init_raw_params(k_param, VOCAB, D_MODEL, N_CLASSES)
    params = prepare_params(raw, N_CLASSES)
    input_ids = jax.random.randint(k_ids, (B, S), 0, VOCAB, dtype=jnp.int32)
    attention_mask = jnp.ones((B, S), jnp.float32)

    out = transformer_model_forward(input_ids, attention_mask, params,
                                    n_classes=N_CLASSES)
    out = jax.block_until_ready(out)
    assert out.shape == (B, S, N_CLASSES), out.shape
    print("KERNEL_OK")
</pallas_src>

<mosaic_0001>
module attributes {stable_mosaic.version = 11 : i64} {
  func.func @_proj_gi_kernel(%arg0: i32, %arg1: memref<16x256xf32, #tpu.memory_space<vmem>>, %arg2: memref<256x128xbf16, #tpu.memory_space<vmem>>, %arg3: memref<1x128xf32, #tpu.memory_space<vmem>>, %arg4: memref<128x384xbf16, #tpu.memory_space<vmem>>, %arg5: memref<1x384xf32, #tpu.memory_space<vmem>>, %arg6: memref<16x384xbf16, #tpu.memory_space<vmem>>) attributes {dimension_semantics = [#tpu.dimension_semantics<parallel>], iteration_bounds = array<i64: 1>, scalar_prefetch = 0 : i64, scratch_operands = 0 : i64, tpu.core_type = #tpu.core_type<tc>, window_params = [{transform_indices = @transform_0, window_bounds = array<i64: 16, 256>}, {pipeline_mode = #tpu.pipeline_mode<synchronous>, transform_indices = @transform_1, window_bounds = array<i64: 256, 128>}, {pipeline_mode = #tpu.pipeline_mode<synchronous>, transform_indices = @transform_2, window_bounds = array<i64: 1, 128>}, {pipeline_mode = #tpu.pipeline_mode<synchronous>, transform_indices = @transform_3, window_bounds = array<i64: 128, 384>}, {pipeline_mode = #tpu.pipeline_mode<synchronous>, transform_indices = @transform_4, window_bounds = array<i64: 1, 384>}, {transform_indices = @transform_5, window_bounds = array<i64: 16, 384>}]} {
    %c0 = arith.constant 0 : index
    %c0_0 = arith.constant 0 : index
    %0 = vector.load %arg1[%c0, %c0_0] : memref<16x256xf32, #tpu.memory_space<vmem>>, vector<16x256xf32>
    %1 = arith.truncf %0 : vector<16x256xf32> to vector<16x256xbf16>
    %c0_1 = arith.constant 0 : index
    %c0_2 = arith.constant 0 : index
    %2 = vector.load %arg2[%c0_1, %c0_2] : memref<256x128xbf16, #tpu.memory_space<vmem>>, vector<256x128xbf16>
    %cst = arith.constant dense<0.000000e+00> : vector<16x128xf32>
    %3 = tpu.matmul %1, %2, %cst {dimension_numbers = #tpu.dot_dimension_numbers<[1], [0], [0], [1], [0, 0, 1, 1], [], []>} : vector<16x256xbf16>, vector<256x128xbf16>, vector<16x128xf32> -> vector<16x128xf32>
    %c0_3 = arith.constant 0 : index
    %c0_4 = arith.constant 0 : index
    %4 = vector.load %arg3[%c0_3, %c0_4] : memref<1x128xf32, #tpu.memory_space<vmem>>, vector<1x128xf32>
    %5 = vector.broadcast %4 : vector<1x128xf32> to vector<16x128xf32>
    %6 = arith.addf %3, %5 : vector<16x128xf32>
    %7 = arith.truncf %6 : vector<16x128xf32> to vector<16x128xbf16>
    %c0_5 = arith.constant 0 : index
    %c0_6 = arith.constant 0 : index
    %8 = vector.load %arg4[%c0_5, %c0_6] : memref<128x384xbf16, #tpu.memory_space<vmem>>, vector<128x384xbf16>
    %cst_7 = arith.constant dense<0.000000e+00> : vector<16x384xf32>
    %9 = tpu.matmul %7, %8, %cst_7 {dimension_numbers = #tpu.dot_dimension_numbers<[1], [0], [0], [1], [0, 0, 1, 1], [], []>} : vector<16x128xbf16>, vector<128x384xbf16>, vector<16x384xf32> -> vector<16x384xf32>
    %c0_8 = arith.constant 0 : index
    %c0_9 = arith.constant 0 : index
    %10 = vector.load %arg5[%c0_8, %c0_9] : memref<1x384xf32, #tpu.memory_space<vmem>>, vector<1x384xf32>
    %11 = vector.broadcast %10 : vector<1x384xf32> to vector<16x384xf32>
    %12 = arith.addf %9, %11 : vector<16x384xf32>
    %13 = arith.truncf %12 : vector<16x384xf32> to vector<16x384xbf16>
    %c0_10 = arith.constant 0 : index
    %c0_11 = arith.constant 0 : index
    %14 = vector.load %arg6[%c0_10, %c0_11] : memref<16x384xbf16, #tpu.memory_space<vmem>>, vector<16x384xbf16>
    tpu.vector_store %arg6[%c0_10, %c0_11], %13 {strides = array<i32>} : memref<16x384xbf16, #tpu.memory_space<vmem>>, vector<16x384xbf16>,
    return
  }
  func.func @transform_0(%arg0: i32) -> (i32, i32) {
    %c0_i32 = arith.constant 0 : i32
    %c0_i32_0 = arith.constant 0 : i32
    return %arg0, %c0_i32 : i32, i32
  }
  func.func @transform_1(%arg0: i32) -> (i32, i32) {
    %c0_i32 = arith.constant 0 : i32
    %c0_i32_0 = arith.constant 0 : i32
    %c0_i32_1 = arith.constant 0 : i32
    return %c0_i32, %c0_i32_0 : i32, i32
  }
  func.func @transform_2(%arg0: i32) -> (i32, i32) {
    %c0_i32 = arith.constant 0 : i32
    %c0_i32_0 = arith.constant 0 : i32
    %c0_i32_1 = arith.constant 0 : i32
    return %c0_i32, %c0_i32_0 : i32, i32
  }
  func.func @transform_3(%arg0: i32) -> (i32, i32) {
    %c0_i32 = arith.constant 0 : i32
    %c0_i32_0 = arith.constant 0 : i32
    %c0_i32_1 = arith.constant 0 : i32
    return %c0_i32, %c0_i32_0 : i32, i32
  }
  func.func @transform_4(%arg0: i32) -> (i32, i32) {
    %c0_i32 = arith.constant 0 : i32
    %c0_i32_0 = arith.constant 0 : i32
    %c0_i32_1 = arith.constant 0 : i32
    return %c0_i32, %c0_i32_0 : i32, i32
  }
  func.func @transform_5(%arg0: i32) -> (i32, i32) {
    %c0_i32 = arith.constant 0 : i32
    %c0_i32_0 = arith.constant 0 : i32
    return %arg0, %c0_i32 : i32, i32
  }
}

</mosaic_0001>

<llo_original>
// kernel: tpu_custom_call.1
$region0: #{tpu_custom_call.1}
  #allocation0 [shape = 'u32[]', space=smem, size = 0x4, offset = 0x4, fixed_abs, tag = 'smem constant byte address 0x4 - core index']
  #allocation1 [shape = 'u32[72,128]{1,0:T(1,128)}', space=vmem, size = 0x9000, scoped, tag = 'internal scratch']
  %s0 = inlined_call_operand.hbm [shape: f32[16,256], index: 0, kind: input, shape index: {}]
  %s1 = inlined_call_operand.hbm [shape: bf16[256,128], index: 1, kind: input, shape index: {}]
  %s2 = inlined_call_operand.hbm [shape: f32[1,128], index: 2, kind: input, shape index: {}]
  %s3 = inlined_call_operand.hbm [shape: bf16[128,384], index: 3, kind: input, shape index: {}]
  %s4 = inlined_call_operand.vmem [shape: f32[1,384], index: 4, kind: input, shape index: {}]
  %s5 = inlined_call_operand.hbm [shape: bf16[16,384], index: 5, kind: output, shape index: {}]
  %s6 = sld [smem:[#allocation0]]
  $region46: #{tpu_custom_call.1} parent=0
    _
  %s8 = ssub.s32 1, %s6
  %s9 = scalar_select 0, %s8, %s6
  $region1: #{tpu_custom_call.1} parent=0
    #allocation2 [shape = 'u8[16384]{0}', space=vmem, size = 0x4000, scoped, tag = 'input window, operand 0, single buffered']
    #allocation3 [shape = 's32[1]{0}', space=sflag, size = 0x4, scoped, tag = 'scoped memory for tpu_custom_call.1']
    #allocation4 [shape = 's32[1]{0}', space=sflag, size = 0x4, scoped, tag = 'scoped memory for tpu_custom_call.1']
    #allocation5 [shape = 'u8[65536]{0}', space=vmem, size = 0x10000, scoped, tag = 'input window, operand 1, single buffered']
    #allocation6 [shape = 's32[1]{0}', space=sflag, size = 0x4, scoped, tag = 'scoped memory for tpu_custom_call.1']
    #allocation7 [shape = 'u8[512]{0}', space=vmem, size = 0x400, scoped, tag = 'input window, operand 2, single buffered']
    #allocation8 [shape = 'u8[98304]{0}', space=vmem, size = 0x18000, scoped, tag = 'input window, operand 3, single buffered']
    #allocation9 [shape = 's32[1]{0}', space=sflag, size = 0x4, scoped, tag = 'scoped memory for tpu_custom_call.1']
    #allocation10 [shape = 'u8[12288]{0}', space=vmem, size = 0x3000, scoped, tag = 'output window, operand 0, single buffered']
    %10 = vsyncpa [#allocation3], 0
    %11 = vsyncpa [#allocation6], 0
    %12 = vsyncpa [#allocation9], 0
    %13 = vsyncpa [#allocation4], 0
    // Predicated region
    $region2: #{tpu_custom_call.1} parent=1 // pred_check
      _
    $region3: #{tpu_custom_call.1} parent=1 // pred_check_branch
      %15 = sbr.rel (0) target = $region5
    $region4: #{tpu_custom_call.1} parent=1 // pred_region
      %17 = vsyncadd [#allocation3], 0
      %s18 = sshll.u32 %s0, 4
      %s19 = int_to_ptr.hbm [resolvable:$true] %s18
      %s20 = sshll.u32 [#allocation2], 4
      %s21 = int_to_ptr.vmem [resolvable:$true] %s20
      %26 = dma.hbm_to_vmem [thread:$0]  %s19, 512, %s21, [#allocation3], 256, 256, 16
    $region5: #{tpu_custom_call.1} parent=1 // pred_fallthru
      _
    // Predicated region
    $region6: #{tpu_custom_call.1} parent=1 // pred_check
      _
    $region7: #{tpu_custom_call.1} parent=1 // pred_check_branch
      %28 = sbr.rel (0) target = $region9
    $region8: #{tpu_custom_call.1} parent=1 // pred_region
      %30 = vsyncadd [#allocation6], 0
      %s31 = sshll.u32 %s1, 4
      %s32 = int_to_ptr.hbm [resolvable:$true] %s31
      %s33 = sshll.u32 [#allocation5], 4
      %s34 = int_to_ptr.vmem [resolvable:$true] %s33
      %39 = dma.hbm_to_vmem [thread:$0]  %s32, 2048, %s34, [#allocation6], 64, 64, 4
    $region9: #{tpu_custom_call.1} parent=1 // pred_fallthru
      _
    // Predicated region
    $region10: #{tpu_custom_call.1} parent=1 // pred_check
      _
    $region11: #{tpu_custom_call.1} parent=1 // pred_check_branch
      %41 = sbr.rel (0) target = $region13
    $region12: #{tpu_custom_call.1} parent=1 // pred_region
      %43 = vsyncadd [#allocation6], 0
      %s45 = sshll.u32 %s2, 4
      %s46 = int_to_ptr.hbm [resolvable:$true] %s45
      %s47 = sshll.u32 [#allocation7], 4
      %s48 = int_to_ptr.vmem [resolvable:$true] %s47
      %50 = dma.hbm_to_vmem [thread:$0]  %s46, 16, %s48, [#allocation6]
    $region13: #{tpu_custom_call.1} parent=1 // pred_fallthru
      _
    // Predicated region
    $region14: #{tpu_custom_call.1} parent=1 // pred_check
      _
    $region15: #{tpu_custom_call.1} parent=1 // pred_check_branch
      %52 = sbr.rel (0) target = $region17
    $region16: #{tpu_custom_call.1} parent=1 // pred_region
      %54 = vsyncadd [#allocation9], 0
      %s55 = sshll.u32 %s3, 4
      %s56 = int_to_ptr.hbm [resolvable:$true] %s55
      %s57 = sshll.u32 [#allocation8], 4
      %s58 = int_to_ptr.vmem [resolvable:$true] %s57
      %63 = dma.hbm_to_vmem [thread:$0]  %s56, 3072, %s58, [#allocation9], 192, 192, 12
    $region17: #{tpu_custom_call.1} parent=1 // pred_fallthru
      _
    // Predicated region
    $region18: #{tpu_custom_call.1} parent=1 // pred_check
      _
    $region19: #{tpu_custom_call.1} parent=1 // pred_check_branch
      %65 = sbr.rel (0) target = $region21
    $region20: #{tpu_custom_call.1} parent=1 // pred_region
      _
    $region21: #{tpu_custom_call.1} parent=1 // pred_fallthru
      _
    // Predicated region
    $region22: #{tpu_custom_call.1} parent=1 // pred_check
      _
    $region23: #{tpu_custom_call.1} parent=1 // pred_check_branch
      %67 = sbr.rel (0) target = $region25
    $region24: #{tpu_custom_call.1} parent=1 // pred_region
      %69 = dma.done [#allocation3], 512
    $region25: #{tpu_custom_call.1} parent=1 // pred_fallthru
      _
    // Predicated region
    $region26: #{tpu_custom_call.1} parent=1 // pred_check
      _
    $region27: #{tpu_custom_call.1} parent=1 // pred_check_branch
      %71 = sbr.rel (0) target = $region29
    $region28: #{tpu_custom_call.1} parent=1 // pred_region
      %73 = dma.done [#allocation6], 2048
    $region29: #{tpu_custom_call.1} parent=1 // pred_fallthru
      _
    // Predicated region
    $region30: #{tpu_custom_call.1} parent=1 // pred_check
      _
    $region31: #{tpu_custom_call.1} parent=1 // pred_check_branch
      %75 = sbr.rel (0) target = $region33
    $region32: #{tpu_custom_call.1} parent=1 // pred_region
      %77 = dma.done [#allocation6], 16
    $region33: #{tpu_custom_call.1} parent=1 // pred_fallthru
      _
    // Predicated region
    $region34: #{tpu_custom_call.1} parent=1 // pred_check
      _
    $region35: #{tpu_custom_call.1} parent=1 // pred_check_branch
      %79 = sbr.rel (0) target = $region37
    $region36: #{tpu_custom_call.1} parent=1 // pred_region
      %81 = dma.done [#allocation9], 3072
    $region37: #{tpu_custom_call.1} parent=1 // pred_fallthru
      _
    %v82 = vld [vmem:[#allocation2] sm:$0xff]
    %v83 = vld [vmem:[#allocation2 + $0x8] sm:$0xff]
    %v84 = vld [vmem:[#allocation2 + $0x10] sm:$0xff]
    %v85 = vld [vmem:[#allocation2 + $0x18] sm:$0xff]
    %v86 = vpack.c.bf16 %v84, %v82
    %v87 = vpack.c.bf16 %v85, %v83
    %v88 = vld [vmem:[#allocation5] sm:$0xf]
    %v89 = vld [vmem:[#allocation5 + $0x4] sm:$0xf]
    %v90 = vld [vmem:[#allocation5 + $0x8] sm:$0xf]
    %v91 = vld [vmem:[#allocation5 + $0xc] sm:$0xf]
    %v92 = vld [vmem:[#allocation5 + $0x10] sm:$0xf]
    %v93 = vld [vmem:[#allocation5 + $0x14] sm:$0xf]
    %v94 = vld [vmem:[#allocation5 + $0x18] sm:$0xf]
    %v95 = vld [vmem:[#allocation5 + $0x1c] sm:$0xf]
    %v96 = vld [vmem:[#allocation5 + $0x20] sm:$0xf]
    %v97 = vld [vmem:[#allocation5 + $0x24] sm:$0xf]
    %v98 = vld [vmem:[#allocation5 + $0x28] sm:$0xf]
    %v99 = vld [vmem:[#allocation5 + $0x2c] sm:$0xf]
    %v100 = vld [vmem:[#allocation5 + $0x30] sm:$0xf]
    %v101 = vld [vmem:[#allocation5 + $0x34] sm:$0xf]
    %v102 = vld [vmem:[#allocation5 + $0x38] sm:$0xf]
    %v103 = vld [vmem:[#allocation5 + $0x3c] sm:$0xf]
    %v104 = vld [vmem:[#allocation5 + $0x40] sm:$0xf]
    %v105 = vld [vmem:[#allocation5 + $0x44] sm:$0xf]
    %v106 = vld [vmem:[#allocation5 + $0x48] sm:$0xf]
    %v107 = vld [vmem:[#allocation5 + $0x4c] sm:$0xf]
    %v108 = vld [vmem:[#allocation5 + $0x50] sm:$0xf]
    %v109 = vld [vmem:[#allocation5 + $0x54] sm:$0xf]
    %v110 = vld [vmem:[#allocation5 + $0x58] sm:$0xf]
    %v111 = vld [vmem:[#allocation5 + $0x5c] sm:$0xf]
    %v112 = vld [vmem:[#allocation5 + $0x60] sm:$0xf]
    %v113 = vld [vmem:[#allocation5 + $0x64] sm:$0xf]
    %v114 = vld [vmem:[#allocation5 + $0x68] sm:$0xf]
    %v115 = vld [vmem:[#allocation5 + $0x6c] sm:$0xf]
    %v116 = vld [vmem:[#allocation5 + $0x70] sm:$0xf]
    %v117 = vld [vmem:[#allocation5 + $0x74] sm:$0xf]
    %v118 = vld [vmem:[#allocation5 + $0x78] sm:$0xf]
    %v119 = vld [vmem:[#allocation5 + $0x7c] sm:$0xf]
    %v120 = vld [vmem:[#allocation7] sm:$0x1]
    %v122 = vperm.slane %v120, 0
    %v156 = vunpack.c.l.b16 %v88
    %v157 = vunpack.c.l.b16 %v89
    %v158 = vunpack.c.l.b16 %v90
    %v159 = vunpack.c.l.b16 %v91
    %v160 = vunpack.c.l.b16 %v92
    %v161 = vunpack.c.l.b16 %v93
    %v162 = vunpack.c.l.b16 %v94
    %v163 = vunpack.c.l.b16 %v95
    %v164 = vunpack.c.l.b16 %v96
    %v165 = vunpack.c.l.b16 %v97
    %v166 = vunpack.c.l.b16 %v98
    %v167 = vunpack.c.l.b16 %v99
    %v168 = vunpack.c.l.b16 %v100
    %v169 = vunpack.c.l.b16 %v101
    %v170 = vunpack.c.l.b16 %v102
    %v171 = vunpack.c.l.b16 %v103
    %v172 = vunpack.c.l.b16 %v104
    %v173 = vunpack.c.l.b16 %v105
    %v174 = vunpack.c.l.b16 %v106
    %v175 = vunpack.c.l.b16 %v107
    %v176 = vunpack.c.l.b16 %v108
    %v177 = vunpack.c.l.b16 %v109
    %v178 = vunpack.c.l.b16 %v110
    %v179 = vunpack.c.l.b16 %v111
    %v180 = vunpack.c.l.b16 %v112
    %v181 = vunpack.c.l.b16 %v113
    %v182 = vunpack.c.l.b16 %v114
    %v183 = vunpack.c.l.b16 %v115
    %v184 = vunpack.c.l.b16 %v116
    %v185 = vunpack.c.l.b16 %v117
    %v186 = vunpack.c.l.b16 %v118
    %v187 = vunpack.c.l.b16 %v119
    %v188 = vpack.c.b16 %v157, %v156
    %v189 = vpack.c.b16 %v159, %v158
    %v190 = vpack.c.b16 %v161, %v160
    %v191 = vpack.c.b16 %v163, %v162
    %v192 = vpack.c.b16 %v165, %v164
    %v193 = vpack.c.b16 %v167, %v166
    %v194 = vpack.c.b16 %v169, %v168
    %v195 = vpack.c.b16 %v171, %v170
    %v196 = vpack.c.b16 %v173, %v172
    %v197 = vpack.c.b16 %v175, %v174
    %v198 = vpack.c.b16 %v177, %v176
    %v199 = vpack.c.b16 %v179, %v178
    %v200 = vpack.c.b16 %v181, %v180
    %v201 = vpack.c.b16 %v183, %v182
    %v202 = vpack.c.b16 %v185, %v184
    %v203 = vpack.c.b16 %v187, %v186
    %220 = vmatpush.bf16.msra.mxu0 %v195
    %221 = vmatpush.bf16.msra.mxu0 %v194
    %222 = vmatpush.bf16.msra.mxu0 %v193
    %223 = vmatpush.bf16.msra.mxu0 %v192
    %224 = vmatpush.bf16.msra.mxu0 %v191
    %225 = vmatpush.bf16.msra.mxu0 %v190
    %226 = vmatpush.bf16.msra.mxu0 %v189
    %227 = vmatpush.bf16.msra.mxu0 %v188
    %228 = vmatmul.bf16.gmra.mxu0 %v86
    %v229 = vpop.f32.mrf.mxu0
    %v230 = vadd.f32 %v122, %v229
    %v231 = vpop.f32.mrf.mxu0
    %v232 = vadd.f32 %v122, %v231
    %233 = vdwg.mxu0
    %234 = vmatpush.bf16.msra.mxu0 %v203
    %235 = vmatpush.bf16.msra.mxu0 %v202
    %236 = vmatpush.bf16.msra.mxu0 %v201
    %237 = vmatpush.bf16.msra.mxu0 %v200
    %238 = vmatpush.bf16.msra.mxu0 %v199
    %239 = vmatpush.bf16.msra.mxu0 %v198
    %240 = vmatpush.bf16.msra.mxu0 %v197
    %241 = vmatpush.bf16.msra.mxu0 %v196
    %242 = vmatmul.bf16.gmra.mxu0 %v87
    %v243 = vpop.f32.mrf.mxu0
    %v244 = vadd.f32 %v230, %v243
    %v245 = vpop.f32.mrf.mxu0
    %v246 = vadd.f32 %v232, %v245
    %247 = vdwg.mxu0
    %v248 = vpack.c.bf16 %v246, %v244
    %v249 = vld [vmem:[#allocation8] sm:$0xff]
    %v250 = vld [vmem:[#allocation8 + $0x8] sm:$0xf]
    %v251 = vld [vmem:[#allocation8 + $0xc] sm:$0xff]
    %v252 = vld [vmem:[#allocation8 + $0x14] sm:$0xf]
    %v253 = vld [vmem:[#allocation8 + $0x18] sm:$0xff]
    %v254 = vld [vmem:[#allocation8 + $0x20] sm:$0xf]
    %v255 = vld [vmem:[#allocation8 + $0x24] sm:$0xff]
    %v256 = vld [vmem:[#allocation8 + $0x2c] sm:$0xf]
    %v257 = vld [vmem:[#allocation8 + $0x30] sm:$0xff]
    %v258 = vld [vmem:[#allocation8 + $0x38] sm:$0xf]
    %v259 = vld [vmem:[#allocation8 + $0x3c] sm:$0xff]
    %v260 = vld [vmem:[#allocation8 + $0x44] sm:$0xf]
    %v261 = vld [vmem:[#allocation8 + $0x48] sm:$0xff]
    %v262 = vld [vmem:[#allocation8 + $0x50] sm:$0xf]
    %v263 = vld [vmem:[#allocation8 + $0x54] sm:$0xff]
    %v264 = vld [vmem:[#allocation8 + $0x5c] sm:$0xf]
    %v265 = vld [vmem:[#allocation8 + $0x60] sm:$0xff]
    %v266 = vld [vmem:[#allocation8 + $0x68] sm:$0xf]
    %v267 = vld [vmem:[#allocation8 + $0x6c] sm:$0xff]
    %v268 = vld [vmem:[#allocation8 + $0x74] sm:$0xf]
    %v269 = vld [vmem:[#allocation8 + $0x78] sm:$0xff]
    %v270 = vld [vmem:[#allocation8 + $0x80] sm:$0xf]
    %v271 = vld [vmem:[#allocation8 + $0x84] sm:$0xff]
    %v272 = vld [vmem:[#allocation8 + $0x8c] sm:$0xf]
    %v273 = vld [vmem:[#allocation8 + $0x90] sm:$0xff]
    %v274 = vld [vmem:[#allocation8 + $0x98] sm:$0xf]
    %v275 = vld [vmem:[#allocation8 + $0x9c] sm:$0xff]
    %v276 = vld [vmem:[#allocation8 + $0xa4] sm:$0xf]
    %v277 = vld [vmem:[#allocation8 + $0xa8] sm:$0xff]
    %v278 = vld [vmem:[#allocation8 + $0xb0] sm:$0xf]
    %v279 = vld [vmem:[#allocation8 + $0xb4] sm:$0xff]
    %v280 = vld [vmem:[#allocation8 + $0xbc] sm:$0xf]
    %v281 = vld [vmem:[%s4] sm:$0x7]
    %v283 = vperm.slane %v281, 0
    %v284 = vperm.slane %v281, 1
    %v285 = vperm.slane %v281, 2
    %v321 = vunpack.c.l.b16 %v249
    %v322 = vunpack.c.h.b16 %v249
    %v323 = vunpack.c.l.b16 %v250
    %v324 = vunpack.c.l.b16 %v251
    %v325 = vunpack.c.h.b16 %v251
    %v326 = vunpack.c.l.b16 %v252
    %v327 = vunpack.c.l.b16 %v253
    %v328 = vunpack.c.h.b16 %v253
    %v329 = vunpack.c.l.b16 %v254
    %v330 = vunpack.c.l.b16 %v255
    %v331 = vunpack.c.h.b16 %v255
    %v332 = vunpack.c.l.b16 %v256
    %v333 = vunpack.c.l.b16 %v257
    %v334 = vunpack.c.h.b16 %v257
    %v335 = vunpack.c.l.b16 %v258
    %v336 = vunpack.c.l.b16 %v259
    %v337 = vunpack.c.h.b16 %v259
    %v338 = vunpack.c.l.b16 %v260
    %v339 = vunpack.c.l.b16 %v261
    %v340 = vunpack.c.h.b16 %v261
    %v341 = vunpack.c.l.b16 %v262
    %v342 = vunpack.c.l.b16 %v263
    %v343 = vunpack.c.h.b16 %v263
    %v344 = vunpack.c.l.b16 %v264
    %v345 = vunpack.c.l.b16 %v265
    %v346 = vunpack.c.h.b16 %v265
    %v347 = vunpack.c.l.b16 %v266
    %v348 = vunpack.c.l.b16 %v267
    %v349 = vunpack.c.h.b16 %v267
    %v350 = vunpack.c.l.b16 %v268
    %v351 = vunpack.c.l.b16 %v269
    %v352 = vunpack.c.h.b16 %v269
    %v353 = vunpack.c.l.b16 %v270
    %v354 = vunpack.c.l.b16 %v271
    %v355 = vunpack.c.h.b16 %v271
    %v356 = vunpack.c.l.b16 %v272
    %v357 = vunpack.c.l.b16 %v273
    %v358 = vunpack.c.h.b16 %v273
    %v359 = vunpack.c.l.b16 %v274
    %v360 = vunpack.c.l.b16 %v275
    %v361 = vunpack.c.h.b16 %v275
    %v362 = vunpack.c.l.b16 %v276
    %v363 = vunpack.c.l.b16 %v277
    %v364 = vunpack.c.h.b16 %v277
    %v365 = vunpack.c.l.b16 %v278
    %v366 = vunpack.c.l.b16 %v279
    %v367 = vunpack.c.h.b16 %v279
    %v368 = vunpack.c.l.b16 %v280
    %v369 = vpack.c.b16 %v324, %v321
    %v370 = vpack.c.b16 %v325, %v322
    %v371 = vpack.c.b16 %v326, %v323
    %v372 = vpack.c.b16 %v330, %v327
    %v373 = vpack.c.b16 %v331, %v328
    %v374 = vpack.c.b16 %v332, %v329
    %v375 = vpack.c.b16 %v336, %v333
    %v376 = vpack.c.b16 %v337, %v334
    %v377 = vpack.c.b16 %v338, %v335
    %v378 = vpack.c.b16 %v342, %v339
    %v379 = vpack.c.b16 %v343, %v340
    %v380 = vpack.c.b16 %v344, %v341
    %v381 = vpack.c.b16 %v348, %v345
    %v382 = vpack.c.b16 %v349, %v346
    %v383 = vpack.c.b16 %v350, %v347
    %v384 = vpack.c.b16 %v354, %v351
    %v385 = vpack.c.b16 %v355, %v352
    %v386 = vpack.c.b16 %v356, %v353
    %v387 = vpack.c.b16 %v360, %v357
    %v388 = vpack.c.b16 %v361, %v358
    %v389 = vpack.c.b16 %v362, %v359
    %v390 = vpack.c.b16 %v366, %v363
    %v391 = vpack.c.b16 %v367, %v364
    %v392 = vpack.c.b16 %v368, %v365
    %417 = vmatpush.bf16.msra.mxu0 %v390
    %418 = vmatpush.bf16.msra.mxu0 %v387
    %419 = vmatpush.bf16.msra.mxu0 %v384
    %420 = vmatpush.bf16.msra.mxu0 %v381
    %421 = vmatpush.bf16.msra.mxu0 %v378
    %422 = vmatpush.bf16.msra.mxu0 %v375
    %423 = vmatpush.bf16.msra.mxu0 %v372
    %424 = vmatpush.bf16.msra.mxu0 %v369
    %425 = vmatmul.bf16.gmra.mxu0 %v248
    %v426 = vpop.f32.mrf.mxu0
    %v427 = vadd.f32 %v283, %v426
    %v428 = vpop.f32.mrf.mxu0
    %v429 = vadd.f32 %v283, %v428
    %430 = vdwg.mxu0
    %431 = vmatpush.bf16.msra.mxu0 %v391
    %432 = vmatpush.bf16.msra.mxu0 %v388
    %433 = vmatpush.bf16.msra.mxu0 %v385
    %434 = vmatpush.bf16.msra.mxu0 %v382
    %435 = vmatpush.bf16.msra.mxu0 %v379
    %436 = vmatpush.bf16.msra.mxu0 %v376
    %437 = vmatpush.bf16.msra.mxu0 %v373
    %438 = vmatpush.bf16.msra.mxu0 %v370
    %439 = vmatmul.bf16.gmra.mxu0 %v248
    %v440 = vpop.f32.mrf.mxu0
    %v441 = vadd.f32 %v284, %v440
    %v442 = vpop.f32.mrf.mxu0
    %v443 = vadd.f32 %v284, %v442
    %444 = vdwg.mxu0
    %445 = vmatpush.bf16.msra.mxu0 %v392
    %446 = vmatpush.bf16.msra.mxu0 %v389
    %447 = vmatpush.bf16.msra.mxu0 %v386
    %448 = vmatpush.bf16.msra.mxu0 %v383
    %449 = vmatpush.bf16.msra.mxu0 %v380
    %450 = vmatpush.bf16.msra.mxu0 %v377
    %451 = vmatpush.bf16.msra.mxu0 %v374
    %452 = vmatpush.bf16.msra.mxu0 %v371
    %453 = vmatmul.bf16.gmra.mxu0 %v248
    %v454 = vpop.f32.mrf.mxu0
    %v455 = vadd.f32 %v285, %v454
    %v456 = vpop.f32.mrf.mxu0
    %v457 = vadd.f32 %v285, %v456
    %458 = vdwg.mxu0
    %v459 = vpack.c.bf16 %v441, %v427
    %v460 = vpack.c.bf16 %v455, %v455
    %v461 = vpack.c.bf16 %v443, %v429
    %v462 = vpack.c.bf16 %v457, %v457
    %463 = vst [vmem:[#allocation10] sm:$0xff] %v459
    %464 = vst [vmem:[#allocation10 + $0x8] sm:$0xf] %v460
    %465 = vst [vmem:[#allocation10 + $0xc] sm:$0xff] %v461
    %466 = vst [vmem:[#allocation10 + $0x14] sm:$0xf] %v462
    // Predicated region
    $region38: #{tpu_custom_call.1} parent=1 // pred_check
      _
    $region39: #{tpu_custom_call.1} parent=1 // pred_check_branch
      %468 = sbr.rel (0) target = $region41
    $region40: #{tpu_custom_call.1} parent=1 // pred_region
      %470 = vsyncadd [#allocation4], 0
      %s471 = sshll.u32 [#allocation10], 4
      %s472 = int_to_ptr.vmem [resolvable:$true] %s471
      %s473 = sshll.u32 %s5, 4
      %s474 = int_to_ptr.hbm [resolvable:$true] %s473
      %479 = dma.vmem_to_hbm [thread:$0]  %s472, 384, %s474, [#allocation4], 192, 192, 12
    $region41: #{tpu_custom_call.1} parent=1 // pred_fallthru
      _
    // Predicated region
    $region42: #{tpu_custom_call.1} parent=1 // pred_check
      _
    $region43: #{tpu_custom_call.1} parent=1 // pred_check_branch
      %481 = sbr.rel (0) target = $region45
    $region44: #{tpu_custom_call.1} parent=1 // pred_region
      %483 = dma.done [#allocation4], 384
    $region45: #{tpu_custom_call.1} parent=1 // pred_fallthru
      _
    %484 = vsyncpa [#allocation3], 1
    %485 = vsyncpa [#allocation6], 1
    %486 = vsyncpa [#allocation9], 1
    %487 = vsyncpa [#allocation4], 1

</llo_original>
